<compile_context>
chip_gen: v5e
topology: v5e:2x2
jax: 0.10.0
libtpu: 0.0.40
codegen_flags: <defaults>
</compile_context>

<pallas_src>
import math

import jax
import jax.numpy as jnp
from jax.experimental import pallas as pl
from jax.experimental.pallas import tpu as pltpu

PD_EPS = 1e-3                                  # PDNorm's BatchNorm1d eps
CONDITIONS = ("ScanNet", "S3DIS", "Structured3D")


# --------------------------------------------------------------------------- #
# Kernel 1/2: row-tiled y = x @ W (bf16 MXU, f32 acc); accumulate per-column  #
# sum / sum-of-squares (training-mode BN statistics).                         #
# --------------------------------------------------------------------------- #
def _linear_stats_kernel(x_ref, w_ref, stats_ref):
    # No Linear bias and no row masking: padded rows are exact zeros and, with
    # no bias added, contribute nothing to either statistic (the bias itself is
    # exactly cancelled by the training-mode BN mean subtraction downstream).
    y = jnp.dot(x_ref[...], w_ref[...], preferred_element_type=jnp.float32)

    @pl.when(pl.program_id(1) == 0)
    def _():
        stats_ref[...] = jnp.zeros_like(stats_ref)

    upd = jnp.concatenate(
        [jnp.sum(y, axis=0, keepdims=True),          # sum
         jnp.sum(y * y, axis=0, keepdims=True)],     # sum of squares
        axis=0)                                      # (2, C)
    stats_ref[...] += upd[None, :, :]


def linear_stats(x_bf16, w_bf16, *, tile_rows, core_splits=2):
    rows_pad, cin = x_bf16.shape
    cout = w_bf16.shape[1]
    steps = rows_pad // (core_splits * tile_rows)
    stats = pl.pallas_call(
        _linear_stats_kernel,
        grid=(core_splits, steps),
        in_specs=[
            pl.BlockSpec((tile_rows, cin), lambda c, i: (c * steps + i, 0)),
            pl.BlockSpec((cin, cout), lambda c, i: (0, 0)),       # W resident
        ],
        # One accumulator block per core split, summed in the wrapper.
        out_specs=pl.BlockSpec((1, 2, cout), lambda c, i: (c, 0, 0)),
        out_shape=jax.ShapeDtypeStruct((core_splits, 2, cout), jnp.float32),
        compiler_params=pltpu.CompilerParams(
            dimension_semantics=("parallel", "arbitrary")),
    )(x_bf16, w_bf16)
    return jnp.sum(stats, axis=0)                    # (2, C)


# --------------------------------------------------------------------------- #
# Kernel 3: coarse branch computed once: ReLU(BN(feat @ W_proj)), bf16 output. #
# --------------------------------------------------------------------------- #
def _coarse_act_kernel(x_ref, w_ref, ss_ref, o_ref):
    y = jnp.dot(x_ref[...], w_ref[...], preferred_element_type=jnp.float32)
    o_ref[...] = jnp.maximum(y * ss_ref[0:1, :] + ss_ref[1:2, :],
                             0.0).astype(o_ref.dtype)


def coarse_activation(feat_bf16, w_bf16, scale_shift, *, tile_rows):
    rows_pad, cin = feat_bf16.shape
    cout = w_bf16.shape[1]
    return pl.pallas_call(
        _coarse_act_kernel,
        grid=(rows_pad // tile_rows,),
        in_specs=[
            pl.BlockSpec((tile_rows, cin), lambda i: (i, 0)),
            pl.BlockSpec((cin, cout), lambda i: (0, 0)),
            pl.BlockSpec((2, cout), lambda i: (0, 0)),
        ],
        out_specs=pl.BlockSpec((tile_rows, cout), lambda i: (i, 0)),
        out_shape=jax.ShapeDtypeStruct((rows_pad, cout), jnp.bfloat16),
        compiler_params=pltpu.CompilerParams(
            dimension_semantics=("parallel",)),
    )(feat_bf16, w_bf16, scale_shift)


# --------------------------------------------------------------------------- #
# Kernel 4: fused skip branch + gather-as-matmul of the activated coarse rows. #
# --------------------------------------------------------------------------- #
def _unpool_fused_kernel(cl_ref, coarse_ref, skip_ref, wskip_ref, ss_ref, o_ref):
    # Skip-branch matmul first: independent of the gather, so its MXU push
    # overlaps the VPU work of building the one-hot gather matrix below.
    sk = jnp.dot(skip_ref[...], wskip_ref[...],
                 preferred_element_type=jnp.float32)          # (tile, C)
    sk = jnp.maximum(sk * ss_ref[0:1, :] + ss_ref[1:2, :], 0.0)

    # Gather-as-matmul: one-hot (tile, M_pad) from the cluster ids, one bf16
    # MXU matmul against the pre-activated coarse block.  Exact: each row has
    # a single 1.0, so f32 accumulation reproduces the stored bf16 value.
    # TODO(synk): for very large coarse clouds (M >> a few thousand), switch to
    # a manual HBM DMA gather (memory_space=pl.ANY + make_async_copy) instead
    # of keeping the coarse block VMEM-resident / paying O(M) one-hot flops.
    tile, m_pad = cl_ref.shape[0], coarse_ref.shape[0]
    col = jax.lax.broadcasted_iota(jnp.int32, (tile, m_pad), 1)
    onehot = (cl_ref[...] == col).astype(jnp.bfloat16)        # (tile, M_pad)
    up = jnp.dot(onehot, coarse_ref[...],
                 preferred_element_type=jnp.float32)          # (tile, C)

    o_ref[...] = up + sk


def unpool_fused(cluster2d, coarse_act, skip_bf16, wskip_bf16, scale_shift,
                 *, tile_rows):
    n_pad, cskip = skip_bf16.shape
    m_pad, cout = coarse_act.shape
    return pl.pallas_call(
        _unpool_fused_kernel,
        grid=(n_pad // tile_rows,),
        in_specs=[
            pl.BlockSpec((tile_rows, 1), lambda i: (i, 0)),      # cluster ids
            pl.BlockSpec((m_pad, cout), lambda i: (0, 0)),       # coarse acts
            pl.BlockSpec((tile_rows, cskip), lambda i: (i, 0)),  # skip tile
            pl.BlockSpec((cskip, cout), lambda i: (0, 0)),       # W_skip
            pl.BlockSpec((2, cout), lambda i: (0, 0)),           # scale/shift B
        ],
        out_specs=pl.BlockSpec((tile_rows, cout), lambda i: (i, 0)),
        out_shape=jax.ShapeDtypeStruct((n_pad, cout), jnp.float32),
        compiler_params=pltpu.CompilerParams(
            dimension_semantics=("parallel",),
            vmem_limit_bytes=48 * 1024 * 1024),
    )(cluster2d, coarse_act, skip_bf16, wskip_bf16, scale_shift)


# --------------------------------------------------------------------------- #
# Wrapper (forward of UnpoolWithSkip, backend='map', skip=True)               #
# --------------------------------------------------------------------------- #
def _pad_rows(x, multiple):
    rows = x.shape[0]
    rows_pad = ((rows + multiple - 1) // multiple) * multiple
    if rows_pad == rows:
        return x
    pad = [(0, rows_pad - rows)] + [(0, 0)] * (x.ndim - 1)
    return jnp.pad(x, pad)


def _scale_shift(stats, count, gamma, beta, eps):
    mean = stats[0] / count
    var = jnp.maximum(stats[1] / count - mean * mean, 0.0)      # biased, clamped
    scale = gamma * jax.lax.rsqrt(var + eps)
    return jnp.stack([scale, beta - mean * scale], axis=0)      # (2, C)


def unpool_with_skip_forward(params, points, skip_points, cluster, condition,
                             *, stats_tile=256, out_tile=256):
    coord, feat, offset = points
    skip_coord, skip_feat, skip_offset = skip_points
    cond_idx = CONDITIONS.index(condition)

    m_rows = feat.shape[0]
    n_rows = skip_feat.shape[0]

    # bf16 MXU operands (f32 accumulation everywhere).
    wproj_bf = params["proj_w"].astype(jnp.bfloat16)
    wskip_bf = params["skip_w"].astype(jnp.bfloat16)
    feat_bf = feat.astype(jnp.bfloat16)
    skip_bf = skip_feat.astype(jnp.bfloat16)

    # Pass 1: BN batch statistics of both linear branches (cross-tile f32
    # accumulators; rows split 2-way across v7x TensorCores).
    split = 2
    stats_a = linear_stats(_pad_rows(feat_bf, split * stats_tile), wproj_bf,
                           tile_rows=stats_tile, core_splits=split)
    stats_b = linear_stats(_pad_rows(skip_bf, split * stats_tile), wskip_bf,
                           tile_rows=stats_tile, core_splits=split)

    # Condition-selected PDNorm affines folded into per-column scale/shift,
    # computed once (tiny) outside the grids.  NOTE: the Linear biases are
    # intentionally dropped in-kernel: they are exactly cancelled by the
    # training-mode BN mean subtraction.
    ss_a = _scale_shift(stats_a, m_rows, params["proj_g"][cond_idx],
                        params["proj_be"][cond_idx], PD_EPS)
    ss_b = _scale_shift(stats_b, n_rows, params["skip_g"][cond_idx],
                        params["skip_be"][cond_idx], PD_EPS)

    # Pass 2: coarse branch computed once over M rows, lane-dense bf16 output.
    m_pad = max(128, ((m_rows + 127) // 128) * 128)
    coarse_tile = 256 if m_pad % 256 == 0 else 128
    feat_coarse = jnp.pad(feat_bf, ((0, m_pad - m_rows), (0, 0)))
    coarse_act = coarse_activation(feat_coarse, wproj_bf, ss_a,
                                   tile_rows=coarse_tile)

    # Pass 3: fused skip branch + gather + add over the fine (skip) points.
    n_pad = ((n_rows + out_tile - 1) // out_tile) * out_tile
    skip_p = jnp.pad(skip_bf, ((0, n_pad - n_rows), (0, 0)))
    cluster_p = jnp.pad(cluster.astype(jnp.int32),
                        (0, n_pad - n_rows)).reshape(n_pad, 1)
    out = unpool_fused(cluster_p, coarse_act, skip_p, wskip_bf, ss_b,
                       tile_rows=out_tile)
    feat_out = out[:n_rows]        # padded rows gather coarse row 0 -> sliced off

    # TODO(synk): backend='interp' (pointops.interpolation) fallback when
    # cluster is None is not implemented; the Decoder always uses backend='map'.
    return [skip_coord, feat_out, skip_offset, condition, None]


# --------------------------------------------------------------------------- #
# Parameters + pure-JAX reference                                             #
# --------------------------------------------------------------------------- #
def init_params(key, in_ch, skip_ch, out_ch, n_cond):
    def lin(k, cin, cout):
        kw, kb = jax.random.split(k)
        bound = 1.0 / math.sqrt(cin)
        w = jax.random.uniform(kw, (cin, cout), jnp.float32, -bound, bound)  # W^T
        b = jax.random.uniform(kb, (cout,), jnp.float32, -bound, bound)
        return w, b

    ks = jax.random.split(key, 6)
    p = {}
    p["proj_w"], p["proj_b"] = lin(ks[0], in_ch, out_ch)
    p["skip_w"], p["skip_b"] = lin(ks[1], skip_ch, out_ch)
    # PyTorch initialises BN affine to (1, 0); randomise slightly so the
    # per-condition affine path is actually exercised.
    p["proj_g"] = 1.0 + 0.1 * jax.random.normal(ks[2], (n_cond, out_ch), jnp.float32)
    p["proj_be"] = 0.1 * jax.random.normal(ks[3], (n_cond, out_ch), jnp.float32)
    p["skip_g"] = 1.0 + 0.1 * jax.random.normal(ks[4], (n_cond, out_ch), jnp.float32)
    p["skip_be"] = 0.1 * jax.random.normal(ks[5], (n_cond, out_ch), jnp.float32)
    return p


def reference_forward(params, feat, skip_feat, cluster, cond_idx):
    # Mirrors the kernel's numerics: bf16 MXU matmul operands with f32
    # accumulation, bias + BN batch stats + affine + ReLU in f32, and the
    # activated coarse features stored in bf16 before the gather (as the
    # kernel's pass-2 output is bf16).
    def branch(x, w, b, g, be):
        y = jnp.dot(x.astype(jnp.bfloat16), w.astype(jnp.bfloat16),
                    preferred_element_type=jnp.float32) + b
        mean = jnp.mean(y, axis=0, keepdims=True)
        var = jnp.mean((y - mean) ** 2, axis=0, keepdims=True)   # biased (training)
        y = (y - mean) * jax.lax.rsqrt(var + PD_EPS) * g + be
        return jnp.maximum(y, 0.0)

    up_full = branch(feat, params["proj_w"], params["proj_b"],
                     params["proj_g"][cond_idx], params["proj_be"][cond_idx])
    up = up_full.astype(jnp.bfloat16).astype(jnp.float32)[cluster]
    sk = branch(skip_feat, params["skip_w"], params["skip_b"],
                params["skip_g"][cond_idx], params["skip_be"][cond_idx])
    return up + sk


# --------------------------------------------------------------------------- #
# Main                                                                         #
# --------------------------------------------------------------------------- #
if __name__ == "__main__":
    IN_CH, SKIP_CH, OUT_CH = 64, 32, 128      # lane-dense output channels
    M, N = 64, 256                            # coarse / fine (skip) point counts

    key = jax.random.PRNGKey(0)
    ks = jax.random.split(key, 6)
    coord = jax.random.normal(ks[0], (M, 3), jnp.float32)
    feat = jax.random.normal(ks[1], (M, IN_CH), jnp.float32)
    skip_coord = jax.random.normal(ks[2], (N, 3), jnp.float32)
    skip_feat = jax.random.normal(ks[3], (N, SKIP_CH), jnp.float32)
    cluster = jax.random.randint(ks[4], (N,), 0, M, jnp.int32)
    offset = jnp.array([M], jnp.int32)
    skip_offset = jnp.array([N], jnp.int32)

    params = init_params(ks[5], IN_CH, SKIP_CH, OUT_CH, len(CONDITIONS))

    out = unpool_with_skip_forward(
        params,
        (coord, feat, offset),
        (skip_coord, skip_feat, skip_offset),
        cluster,
        condition="ScanNet",
    )
    out_coord, out_feat, out_offset, _, _ = out
    jax.block_until_ready(out_feat)
    assert out_feat.shape == (N, OUT_CH)

    ref_feat = reference_forward(params, feat, skip_feat, cluster,
                                 CONDITIONS.index("ScanNet"))
    max_err = float(jnp.max(jnp.abs(out_feat - ref_feat)))
    assert max_err < 5e-3, f"max abs error vs reference: {max_err}"
    print("KERNEL_OK")
</pallas_src>

<mosaic_0001>
module attributes {stable_mosaic.version = 11 : i64} {
  func.func @_linear_stats_kernel(%arg0: i32, %arg1: i32, %arg2: memref<256x64xbf16, #tpu.memory_space<vmem>>, %arg3: memref<64x128xbf16, #tpu.memory_space<vmem>>, %arg4: memref<1x2x128xf32, #tpu.memory_space<vmem>>) attributes {dimension_semantics = [#tpu.dimension_semantics<parallel>, #tpu.dimension_semantics<arbitrary>], iteration_bounds = array<i64: 2, 1>, scalar_prefetch = 0 : i64, scratch_operands = 0 : i64, tpu.core_type = #tpu.core_type<tc>, window_params = [{transform_indices = @transform_0, window_bounds = array<i64: 256, 64>}, {pipeline_mode = #tpu.pipeline_mode<synchronous>, transform_indices = @transform_1, window_bounds = array<i64: 64, 128>}, {transform_indices = @transform_2, window_bounds = array<i64: 1, 2, 128>}]} {
    %c0 = arith.constant 0 : index
    %c0_0 = arith.constant 0 : index
    %0 = vector.load %arg2[%c0, %c0_0] : memref<256x64xbf16, #tpu.memory_space<vmem>>, vector<256x64xbf16>
    %c0_1 = arith.constant 0 : index
    %c0_2 = arith.constant 0 : index
    %1 = vector.load %arg3[%c0_1, %c0_2] : memref<64x128xbf16, #tpu.memory_space<vmem>>, vector<64x128xbf16>
    %cst = arith.constant dense<0.000000e+00> : vector<256x128xf32>
    %2 = tpu.matmul %0, %1, %cst {dimension_numbers = #tpu.dot_dimension_numbers<[1], [0], [0], [1], [0, 0, 1, 1], [], []>} : vector<256x64xbf16>, vector<64x128xbf16>, vector<256x128xf32> -> vector<256x128xf32>
    %c0_i32 = arith.constant 0 : i32
    %3 = arith.cmpi eq, %arg1, %c0_i32 : i32
    %4 = arith.extui %3 : i1 to i32
    %c0_i32_3 = arith.constant 0 : i32
    %5 = arith.cmpi ne, %4, %c0_i32_3 : i32
    scf.if %5 {
      %cst_12 = arith.constant 0.000000e+00 : f32
      %16 = vector.broadcast %cst_12 : f32 to vector<1x2x128xf32>
      %c0_13 = arith.constant 0 : index
      %c0_14 = arith.constant 0 : index
      %c0_15 = arith.constant 0 : index
      %17 = vector.load %arg4[%c0_13, %c0_14, %c0_15] : memref<1x2x128xf32, #tpu.memory_space<vmem>>, vector<1x2x128xf32>
      tpu.vector_store %arg4[%c0_13, %c0_14, %c0_15], %16 {strides = array<i32>} : memref<1x2x128xf32, #tpu.memory_space<vmem>>, vector<1x2x128xf32>,
    } else {
    }
    %cst_4 = arith.constant dense<0.000000e+00> : vector<128xf32>
    %6 = vector.multi_reduction <add>, %2, %cst_4 [0] : vector<256x128xf32> to vector<128xf32>
    %7 = vector.shape_cast %6 : vector<128xf32> to vector<1x128xf32>
    %8 = arith.mulf %2, %2 : vector<256x128xf32>
    %cst_5 = arith.constant dense<0.000000e+00> : vector<128xf32>
    %9 = vector.multi_reduction <add>, %8, %cst_5 [0] : vector<256x128xf32> to vector<128xf32>
    %10 = vector.shape_cast %9 : vector<128xf32> to vector<1x128xf32>
    %11 = tpu.concatenate %7, %10 in 0 : vector<1x128xf32>, vector<1x128xf32> -> vector<2x128xf32>
    %c0_6 = arith.constant 0 : index
    %c0_7 = arith.constant 0 : index
    %c0_8 = arith.constant 0 : index
    %12 = vector.load %arg4[%c0_6, %c0_7, %c0_8] : memref<1x2x128xf32, #tpu.memory_space<vmem>>, vector<1x2x128xf32>
    %13 = vector.shape_cast %11 : vector<2x128xf32> to vector<1x2x128xf32>
    %14 = arith.addf %12, %13 : vector<1x2x128xf32>
    %c0_9 = arith.constant 0 : index
    %c0_10 = arith.constant 0 : index
    %c0_11 = arith.constant 0 : index
    %15 = vector.load %arg4[%c0_9, %c0_10, %c0_11] : memref<1x2x128xf32, #tpu.memory_space<vmem>>, vector<1x2x128xf32>
    tpu.vector_store %arg4[%c0_9, %c0_10, %c0_11], %14 {strides = array<i32>} : memref<1x2x128xf32, #tpu.memory_space<vmem>>, vector<1x2x128xf32>,
    return
  }
  func.func @transform_0(%arg0: i32, %arg1: i32) -> (i32, i32) {
    %c1_i32 = arith.constant 1 : i32
    %0 = arith.muli %arg0, %c1_i32 : i32
    %1 = arith.addi %0, %arg1 : i32
    %c0_i32 = arith.constant 0 : i32
    %c0_i32_0 = arith.constant 0 : i32
    return %1, %c0_i32 : i32, i32
  }
  func.func @transform_1(%arg0: i32, %arg1: i32) -> (i32, i32) {
    %c0_i32 = arith.constant 0 : i32
    %c0_i32_0 = arith.constant 0 : i32
    %c0_i32_1 = arith.constant 0 : i32
    return %c0_i32, %c0_i32_0 : i32, i32
  }
  func.func @transform_2(%arg0: i32, %arg1: i32) -> (i32, i32, i32) {
    %c0_i32 = arith.constant 0 : i32
    %c0_i32_0 = arith.constant 0 : i32
    %c0_i32_1 = arith.constant 0 : i32
    return %arg0, %c0_i32, %c0_i32_0 : i32, i32, i32
  }
}

</mosaic_0001>

<llo_original>
// kernel: tpu_custom_call.1
$region0: #{tpu_custom_call.1}
  #allocation0 [shape = 'u32[]', space=smem, size = 0x4, offset = 0x4, fixed_abs, tag = 'smem constant byte address 0x4 - core index']
  #allocation1 [shape = 'u32[72,128]{1,0:T(1,128)}', space=vmem, size = 0x9000, scoped, tag = 'internal scratch']
  %s0 = inlined_call_operand.vmem [shape: bf16[512,64], index: 0, kind: input, shape index: {}]
  %s1 = inlined_call_operand.vmem [shape: bf16[64,128], index: 1, kind: input, shape index: {}]
  %s2 = inlined_call_operand.hbm [shape: f32[2,2,128], index: 2, kind: output, shape index: {}]
  %s3 = sld [smem:[#allocation0]]
  $region45: #{tpu_custom_call.1} parent=0
    _
  %s5 = ssub.s32 1, %s3
  %s6 = scalar_select 0, %s5, %s3
  $region1: #{tpu_custom_call.1} parent=0
    #allocation2 [shape = 'u8[2048]{0}', space=vmem, size = 0x800, scoped, tag = 'output window, operand 0']
    #allocation3 [shape = 's32[2]{0}', space=sflag, size = 0x8, scoped, tag = 'scoped memory for tpu_custom_call.1']
    %7 = vsyncpa [#allocation3], 0
    %s8 = scalar_lea.sflag [#allocation3], 1
    %9 = vsyncpa %s8, 0
    loop: start=0, step=1, limit=4
    $region2: #{tpu_custom_call.1} parent=1 // loop_pre_header
      _
    $region3: #{tpu_custom_call.1} parent=1 // loop_header
      %s11 = sphi 0, %s15
      %p12 = scmp.ge.s32.totalorder %s11, 4
      %s18 = sphi 0, %s30
      %s19 = sphi 0, %s26
      %s20 = sphi 0, %s18
      %s21 = sphi 0, %s19
      %s22 = sphi 0, %s20
      %s23 = sphi 0, %s21
      %s35 = sphi 0, %s37
      %s38 = sphi 0, %s35
      %s39 = sphi 0, %s38
      %s55 = sphi 0, %s39
      %s59 = sphi 0, %s59
      %s61 = sphi 0, %s59
      %s62 = sphi 0, %s61
      %s76 = sphi 0, %s62
      %s82 = sphi 0, %s84
      %s85 = sphi 0, %s82
      %s86 = sphi 0, %s85
      %s102 = sphi 0, %s86
    $region4: #{tpu_custom_call.1} parent=1 // loop_header_branch
      %14 = sbr.rel (%p12) target = $region8
    $region5: #{tpu_custom_call.1} parent=1 // loop_body
      %s16 = ssub.s32 %s11, 1
      %s17 = ssub.s32 %s11, 2
      %s24 = sadd.s32 1, %s19
      %p25 = scmp.ge.s32.totalorder %s24, 1
      %s26 = scalar_select %p25, 0, %s24
      %s27 = sadd.s32 1, %s18
      %s28 = scalar_select %p25, %s27, %s18
      %p29 = scmp.ge.s32.totalorder %s28, 2
      %s30 = scalar_select %p29, 0, %s28
      %s31 = sadd.s32 %s18, %s19
      %s32 = sadd.s32 %s30, %s26
      %s33 = ssub.s32 %s31, %s32
      %p34 = scmp.eq.s32.totalorder %s33, 0
      %s36 = sadd.s32 %s35, 1
      %s37 = scalar_select %p34, %s35, %s36
      %p40 = pneg %p34
      %p41 = scmp.eq.s32.totalorder %s11, 1
      %p42 = por %p40, %p41
      %p43 = scmp.ne.s32.totalorder %s35, %s38
      %p44 = scmp.eq.s32.totalorder %s11, 0
      %p45 = por %p43, %p44
      %p46 = scmp.ne.s32.totalorder %s35, %s38
      %p47 = scmp.eq.s32.totalorder %s16, 1
      %p48 = por %p46, %p47
      %p49 = scmp.ne.s32.totalorder %s38, %s39
      %p50 = scmp.eq.s32.totalorder %s16, 0
      %p51 = por %p49, %p50
      %p52 = scmp.ne.s32.totalorder %s38, %s39
      %p53 = scmp.eq.s32.totalorder %s17, 1
      %p54 = por %p52, %p53
      %p56 = scmp.ne.s32.totalorder %s39, %s55
      %p57 = scmp.eq.s32.totalorder %s17, 0
      %p58 = por %p56, %p57
      %s60 = sadd.s32 %s59, 1
      %p63 = scmp.eq.s32.totalorder %s11, 1
      %p64 = scmp.ne.s32.totalorder %s59, %s61
      %p65 = scmp.eq.s32.totalorder %s11, 0
      %p66 = por %p64, %p65
      %p67 = scmp.ne.s32.totalorder %s59, %s61
      %p68 = scmp.eq.s32.totalorder %s16, 1
      %p69 = por %p67, %p68
      %p70 = scmp.ne.s32.totalorder %s61, %s62
      %p71 = scmp.eq.s32.totalorder %s16, 0
      %p72 = por %p70, %p71
      %p73 = scmp.ne.s32.totalorder %s61, %s62
      %p74 = scmp.eq.s32.totalorder %s17, 1
      %p75 = por %p73, %p74
      %p77 = scmp.ne.s32.totalorder %s62, %s76
      %p78 = scmp.eq.s32.totalorder %s17, 0
      %p79 = por %p77, %p78
      %s80 = ssub.s32 %s18, %s30
      %p81 = scmp.eq.s32.totalorder %s80, 0
      %s83 = sadd.s32 %s82, 1
      %s84 = scalar_select %p81, %s82, %s83
      %p87 = pneg %p81
      %p88 = scmp.eq.s32.totalorder %s11, 1
      %p89 = por %p87, %p88
      %p90 = scmp.ne.s32.totalorder %s82, %s85
      %p91 = scmp.eq.s32.totalorder %s11, 0
      %p92 = por %p90, %p91
      %p93 = scmp.ne.s32.totalorder %s82, %s85
      %p94 = scmp.eq.s32.totalorder %s16, 1
      %p95 = por %p93, %p94
      %p96 = scmp.ne.s32.totalorder %s85, %s86
      %p97 = scmp.eq.s32.totalorder %s16, 0
      %p98 = por %p96, %p97
      %p99 = scmp.ne.s32.totalorder %s85, %s86
      %p100 = scmp.eq.s32.totalorder %s17, 1
      %p101 = por %p99, %p100
      %p103 = scmp.ne.s32.totalorder %s86, %s102
      %p104 = scmp.eq.s32.totalorder %s17, 0
      %p105 = por %p103, %p104
      %p106 = scmp.le.s32.totalorder 1, %s11
      %p107 = scmp.lt.s32.totalorder %s11, 3
      %p108 = pnand %p106, %p107
      %p109 = pneg %p108
      // Predicated region
      $region9: #{tpu_custom_call.1} parent=5 // pred_check
        _
      $region10: #{tpu_custom_call.1} parent=5 // pred_check_branch
        %111 = sbr.rel (%p108) target = $region12
      $region11: #{tpu_custom_call.1} parent=5 // pred_region
        %s112 = ssub.s32 %s11, 1
        // Predicated region
        $region13: #{tpu_custom_call.1} parent=11 // pred_check
          %p113 = pneg %p72
        $region14: #{tpu_custom_call.1} parent=11 // pred_check_branch
          %115 = sbr.rel (%p113) target = $region16
        $region15: #{tpu_custom_call.1} parent=11 // pred_region
          _
        $region16: #{tpu_custom_call.1} parent=11 // pred_fallthru
          _
      $region12: #{tpu_custom_call.1} parent=5 // pred_fallthru
        _
      %p116 = scmp.lt.s32.totalorder %s11, 2
      // Predicated region
      $region17: #{tpu_custom_call.1} parent=5 // pred_check
        %p117 = pneg %p116
      $region18: #{tpu_custom_call.1} parent=5 // pred_check_branch
        %119 = sbr.rel (%p117) target = $region20
      $region19: #{tpu_custom_call.1} parent=5 // pred_region
        // Predicated region
        $region21: #{tpu_custom_call.1} parent=19 // pred_check
          %p120 = pneg %p45
        $region22: #{tpu_custom_call.1} parent=19 // pred_check_branch
          %122 = sbr.rel (%p120) target = $region24
        $region23: #{tpu_custom_call.1} parent=19 // pred_region
          %s123 = sadd.s32 %s18, %s19
          %s124 = smul.u32 32, %s123
          %p125 = scmp.lt.s32.totalorder %s124, 63
          %s126 = scalar_select %p125, %s124, 63
          %s127 = smul.addr %s126, 4
          %s128 = scalar_lea.vmem %s0, %s127
          %s129 = sadd.s32 %s18, %s19
          %s130 = smul.u32 32, %s129
        $region24: #{tpu_custom_call.1} parent=19 // pred_fallthru
          _
      $region20: #{tpu_custom_call.1} parent=5 // pred_fallthru
        _
      %p131 = scmp.le.s32.totalorder 1, %s11
      %p132 = scmp.lt.s32.totalorder %s11, 3
      %p133 = pnand %p131, %p132
      %p134 = pneg %p133
      // Predicated region
      $region25: #{tpu_custom_call.1} parent=5 // pred_check
        _
      $region26: #{tpu_custom_call.1} parent=5 // pred_check_branch
        %136 = sbr.rel (%p133) target = $region28
      $region27: #{tpu_custom_call.1} parent=5 // pred_region
        %s137 = ssub.s32 %s11, 1
        %s138 = sadd.s32 %s20, %s21
        %s139 = smul.u32 32, %s138
        %p140 = scmp.lt.s32.totalorder %s139, 63
        %s141 = scalar_select %p140, %s139, 63
        %s142 = smul.addr %s141, 4
        %s143 = scalar_lea.vmem %s0, %s142
        %p144 = pneg %p51
        %p145 = pneg %p48
        %p146 = pneg %p72
        %p147 = pneg %p69
        %p148 = pneg %p98
        %p149 = pneg %p95
        %s150 = sand.u32 %s85, 1
        %s151 = scalar_lea.sflag [#allocation3], %s150
        %s152 = sand.u32 %s85, 1
        %s153 = smul.addr %s152, 2
        %s154 = scalar_lea.vmem [#allocation2], %s153
        %s155 = sadd.s32 %s20, %s21
        %s156 = smul.u32 32, %s155
        %p157 = scmp.lt.s32.totalorder %s156, 63
        %s158 = scalar_select %p157, %s156, 63
        %s159 = smul.addr %s158, 4
        %s160 = scalar_lea.vmem %s0, %s159
        %s161 = sadd.s32 %s20, %s21
        %s162 = smul.u32 32, %s161
        %v164 = vld [vmem:[%s160] sm:$0xf]
        %v165 = vld [vmem:[%s160 + $0x4] sm:$0xf]
        %v166 = vld [vmem:[%s160 + $0x8] sm:$0xf]
        %v167 = vld [vmem:[%s160 + $0xc] sm:$0xf]
        %v168 = vld [vmem:[%s160 + $0x10] sm:$0xf]
        %v169 = vld [vmem:[%s160 + $0x14] sm:$0xf]
        %v170 = vld [vmem:[%s160 + $0x18] sm:$0xf]
        %v171 = vld [vmem:[%s160 + $0x1c] sm:$0xf]
        %v172 = vld [vmem:[%s160 + $0x20] sm:$0xf]
        %v173 = vld [vmem:[%s160 + $0x24] sm:$0xf]
        %v174 = vld [vmem:[%s160 + $0x28] sm:$0xf]
        %v175 = vld [vmem:[%s160 + $0x2c] sm:$0xf]
        %v176 = vld [vmem:[%s160 + $0x30] sm:$0xf]
        %v177 = vld [vmem:[%s160 + $0x34] sm:$0xf]
        %v178 = vld [vmem:[%s160 + $0x38] sm:$0xf]
        %v179 = vld [vmem:[%s160 + $0x3c] sm:$0xf]
        %v180 = vld [vmem:[%s160 + $0x40] sm:$0xf]
        %v181 = vld [vmem:[%s160 + $0x44] sm:$0xf]
        %v182 = vld [vmem:[%s160 + $0x48] sm:$0xf]
        %v183 = vld [vmem:[%s160 + $0x4c] sm:$0xf]
        %v184 = vld [vmem:[%s160 + $0x50] sm:$0xf]
        %v185 = vld [vmem:[%s160 + $0x54] sm:$0xf]
        %v186 = vld [vmem:[%s160 + $0x58] sm:$0xf]
        %v187 = vld [vmem:[%s160 + $0x5c] sm:$0xf]
        %v188 = vld [vmem:[%s160 + $0x60] sm:$0xf]
        %v189 = vld [vmem:[%s160 + $0x64] sm:$0xf]
        %v190 = vld [vmem:[%s160 + $0x68] sm:$0xf]
        %v191 = vld [vmem:[%s160 + $0x6c] sm:$0xf]
        %v192 = vld [vmem:[%s160 + $0x70] sm:$0xf]
        %v193 = vld [vmem:[%s160 + $0x74] sm:$0xf]
        %v194 = vld [vmem:[%s160 + $0x78] sm:$0xf]
        %v195 = vld [vmem:[%s160 + $0x7c] sm:$0xf]
        %v196 = vld [vmem:[%s1] sm:$0xf]
        %v197 = vld [vmem:[%s1 + $0x4] sm:$0xf]
        %v198 = vld [vmem:[%s1 + $0x8] sm:$0xf]
        %v199 = vld [vmem:[%s1 + $0xc] sm:$0xf]
        %v200 = vld [vmem:[%s1 + $0x10] sm:$0xf]
        %v201 = vld [vmem:[%s1 + $0x14] sm:$0xf]
        %v202 = vld [vmem:[%s1 + $0x18] sm:$0xf]
        %v203 = vld [vmem:[%s1 + $0x1c] sm:$0xf]
        %v236 = vunpack.c.l.b16 %v164
        %v237 = vunpack.c.l.b16 %v165
        %v238 = vunpack.c.l.b16 %v166
        %v239 = vunpack.c.l.b16 %v167
        %v240 = vunpack.c.l.b16 %v168
        %v241 = vunpack.c.l.b16 %v169
        %v242 = vunpack.c.l.b16 %v170
        %v243 = vunpack.c.l.b16 %v171
        %v244 = vunpack.c.l.b16 %v172
        %v245 = vunpack.c.l.b16 %v173
        %v246 = vunpack.c.l.b16 %v174
        %v247 = vunpack.c.l.b16 %v175
        %v248 = vunpack.c.l.b16 %v176
        %v249 = vunpack.c.l.b16 %v177
        %v250 = vunpack.c.l.b16 %v178
        %v251 = vunpack.c.l.b16 %v179
        %v252 = vunpack.c.l.b16 %v180
        %v253 = vunpack.c.l.b16 %v181
        %v254 = vunpack.c.l.b16 %v182
        %v255 = vunpack.c.l.b16 %v183
        %v256 = vunpack.c.l.b16 %v184
        %v257 = vunpack.c.l.b16 %v185
        %v258 = vunpack.c.l.b16 %v186
        %v259 = vunpack.c.l.b16 %v187
        %v260 = vunpack.c.l.b16 %v188
        %v261 = vunpack.c.l.b16 %v189
        %v262 = vunpack.c.l.b16 %v190
        %v263 = vunpack.c.l.b16 %v191
        %v264 = vunpack.c.l.b16 %v192
        %v265 = vunpack.c.l.b16 %v193
        %v266 = vunpack.c.l.b16 %v194
        %v267 = vunpack.c.l.b16 %v195
        %v268 = vpack.c.b16 %v237, %v236
        %v269 = vpack.c.b16 %v239, %v238
        %v270 = vpack.c.b16 %v241, %v240
        %v271 = vpack.c.b16 %v243, %v242
        %v272 = vpack.c.b16 %v245, %v244
        %v273 = vpack.c.b16 %v247, %v246
        %v274 = vpack.c.b16 %v249, %v248
        %v275 = vpack.c.b16 %v251, %v250
        %v276 = vpack.c.b16 %v253, %v252
        %v277 = vpack.c.b16 %v255, %v254
        %v278 = vpack.c.b16 %v257, %v256
        %v279 = vpack.c.b16 %v259, %v258
        %v280 = vpack.c.b16 %v261, %v260
        %v281 = vpack.c.b16 %v263, %v262
        %v282 = vpack.c.b16 %v265, %v264
        %v283 = vpack.c.b16 %v267, %v266
        %v292 = vunpack.c.l.b16 %v196
        %v293 = vunpack.c.l.b16 %v197
        %v294 = vunpack.c.l.b16 %v198
        %v295 = vunpack.c.l.b16 %v199
        %v296 = vunpack.c.l.b16 %v200
        %v297 = vunpack.c.l.b16 %v201
        %v298 = vunpack.c.l.b16 %v202
        %v299 = vunpack.c.l.b16 %v203
        %v300 = vpack.c.b16 %v293, %v292
        %v301 = vpack.c.b16 %v295, %v294
        %v302 = vpack.c.b16 %v297, %v296
        %v303 = vpack.c.b16 %v299, %v298
        %vm308 = vcmask 523264
        %v310 = vsel %vm308, %v268, 0
        %v313 = vsel %vm308, %v269, 0
        %v316 = vsel %vm308, %v270, 0
        %v319 = vsel %vm308, %v271, 0
        %v322 = vsel %vm308, %v272, 0
        %v325 = vsel %vm308, %v273, 0
        %v328 = vsel %vm308, %v274, 0
        %v331 = vsel %vm308, %v275, 0
        %v334 = vsel %vm308, %v276, 0
        %v337 = vsel %vm308, %v277, 0
        %v340 = vsel %vm308, %v278, 0
        %v343 = vsel %vm308, %v279, 0
        %v346 = vsel %vm308, %v280, 0
        %v349 = vsel %vm308, %v281, 0
        %v352 = vsel %vm308, %v282, 0
        %v355 = vsel %vm308, %v283, 0
        %357 = vmatpush.bf16.msra.mxu0 0
        %358 = vmatpush.bf16.msra.mxu0 0
        %359 = vmatpush.bf16.msra.mxu0 0
        %360 = vmatpush.bf16.msra.mxu0 0
        %361 = vmatpush.bf16.msra.mxu0 %v303
        %362 = vmatpush.bf16.msra.mxu0 %v302
        %363 = vmatpush.bf16.msra.mxu0 %v301
        %364 = vmatpush.bf16.msra.mxu0 %v300
        %365 = vmatmul.bf16.gmra.mxu0 %v310
        %v366 = vpop.f32.mrf.mxu0
        %v367 = vadd.f32 0.0, %v366
        %v368 = vpop.f32.mrf.mxu0
        %v369 = vadd.f32 0.0, %v368
        %370 = vmatmul.bf16.gmra.mxu0 %v313
        %v371 = vpop.f32.mrf.mxu0
        %v372 = vadd.f32 0.0, %v371
        %v373 = vpop.f32.mrf.mxu0
        %v374 = vadd.f32 0.0, %v373
        %375 = vmatmul.bf16.gmra.mxu0 %v316
        %v376 = vpop.f32.mrf.mxu0
        %v377 = vadd.f32 0.0, %v376
        %v378 = vpop.f32.mrf.mxu0
        %v379 = vadd.f32 0.0, %v378
        %380 = vmatmul.bf16.gmra.mxu0 %v319
        %v381 = vpop.f32.mrf.mxu0
        %v382 = vadd.f32 0.0, %v381
        %v383 = vpop.f32.mrf.mxu0
        %v384 = vadd.f32 0.0, %v383
        %385 = vmatmul.bf16.gmra.mxu0 %v322
        %v386 = vpop.f32.mrf.mxu0
        %v387 = vadd.f32 0.0, %v386
        %v388 = vpop.f32.mrf.mxu0
        %v389 = vadd.f32 0.0, %v388
        %390 = vmatmul.bf16.gmra.mxu0 %v325
        %v391 = vpop.f32.mrf.mxu0
        %v392 = vadd.f32 0.0, %v391
        %v393 = vpop.f32.mrf.mxu0
        %v394 = vadd.f32 0.0, %v393
        %395 = vmatmul.bf16.gmra.mxu0 %v328
        %v396 = vpop.f32.mrf.mxu0
        %v397 = vadd.f32 0.0, %v396
        %v398 = vpop.f32.mrf.mxu0
        %v399 = vadd.f32 0.0, %v398
        %400 = vmatmul.bf16.gmra.mxu0 %v331
        %v401 = vpop.f32.mrf.mxu0
        %v402 = vadd.f32 0.0, %v401
        %v403 = vpop.f32.mrf.mxu0
        %v404 = vadd.f32 0.0, %v403
        %405 = vmatmul.bf16.gmra.mxu0 %v334
        %v406 = vpop.f32.mrf.mxu0
        %v407 = vadd.f32 0.0, %v406
        %v408 = vpop.f32.mrf.mxu0
        %v409 = vadd.f32 0.0, %v408
        %410 = vmatmul.bf16.gmra.mxu0 %v337
        %v411 = vpop.f32.mrf.mxu0
        %v412 = vadd.f32 0.0, %v411
        %v413 = vpop.f32.mrf.mxu0
        %v414 = vadd.f32 0.0, %v413
        %415 = vmatmul.bf16.gmra.mxu0 %v340
        %v416 = vpop.f32.mrf.mxu0
        %v417 = vadd.f32 0.0, %v416
        %v418 = vpop.f32.mrf.mxu0
        %v419 = vadd.f32 0.0, %v418
        %420 = vmatmul.bf16.gmra.mxu0 %v343
        %v421 = vpop.f32.mrf.mxu0
        %v422 = vadd.f32 0.0, %v421
        %v423 = vpop.f32.mrf.mxu0
        %v424 = vadd.f32 0.0, %v423
        %425 = vmatmul.bf16.gmra.mxu0 %v346
        %v426 = vpop.f32.mrf.mxu0
        %v427 = vadd.f32 0.0, %v426
        %v428 = vpop.f32.mrf.mxu0
        %v429 = vadd.f32 0.0, %v428
        %430 = vmatmul.bf16.gmra.mxu0 %v349
        %v431 = vpop.f32.mrf.mxu0
        %v432 = vadd.f32 0.0, %v431
        %v433 = vpop.f32.mrf.mxu0
        %v434 = vadd.f32 0.0, %v433
        %435 = vmatmul.bf16.gmra.mxu0 %v352
        %v436 = vpop.f32.mrf.mxu0
        %v437 = vadd.f32 0.0, %v436
        %v438 = vpop.f32.mrf.mxu0
        %v439 = vadd.f32 0.0, %v438
        %440 = vmatmul.bf16.gmra.mxu0 %v355
        %v441 = vpop.f32.mrf.mxu0
        %v442 = vadd.f32 0.0, %v441
        %v443 = vpop.f32.mrf.mxu0
        %v444 = vadd.f32 0.0, %v443
        %445 = vdwg.mxu0
        %p446 = scmp.eq.s32.totalorder %s21, 0
        // Predicated region
        $region29: #{tpu_custom_call.1} parent=27 // pred_check
          %p447 = pneg %p446
        $region30: #{tpu_custom_call.1} parent=27 // pred_check_branch
          %449 = sbr.rel (%p447) target = $region32
        $region31: #{tpu_custom_call.1} parent=27 // pred_region
          %450 = vst [vmem:[%s154] sm:$0x3] 0.0
        $region32: #{tpu_custom_call.1} parent=27 // pred_fallthru
          _
        %v451 = vadd.f32 %v367, %v369
        %v452 = vadd.f32 %v451, %v372
        %v453 = vadd.f32 %v452, %v374
        %v454 = vadd.f32 %v453, %v377
        %v455 = vadd.f32 %v454, %v379
        %v456 = vadd.f32 %v455, %v382
        %v457 = vadd.f32 %v456, %v384
        %v458 = vadd.f32 %v457, %v387
        %v459 = vadd.f32 %v458, %v389
        %v460 = vadd.f32 %v459, %v392
        %v461 = vadd.f32 %v460, %v394
        %v462 = vadd.f32 %v461, %v397
        %v463 = vadd.f32 %v462, %v399
        %v464 = vadd.f32 %v463, %v402
        %v465 = vadd.f32 %v464, %v404
        %v466 = vadd.f32 %v465, %v407
        %v467 = vadd.f32 %v466, %v409
        %v468 = vadd.f32 %v467, %v412
        %v469 = vadd.f32 %v468, %v414
        %v470 = vadd.f32 %v469, %v417
        %v471 = vadd.f32 %v470, %v419
        %v472 = vadd.f32 %v471, %v422
        %v473 = vadd.f32 %v472, %v424
        %v474 = vadd.f32 %v473, %v427
        %v475 = vadd.f32 %v474, %v429
        %v476 = vadd.f32 %v475, %v432
        %v477 = vadd.f32 %v476, %v434
        %v478 = vadd.f32 %v477, %v437
        %v479 = vadd.f32 %v478, %v439
        %v480 = vadd.f32 %v479, %v442
        %v481 = vadd.f32 %v480, %v444
        %v482 = vrot.slane %v481, 4
        %v483 = vadd.f32 %v481, %v482
        %v484 = vrot.slane %v483, 2
        %v485 = vadd.f32 %v483, %v484
        %v486 = vrot.slane %v485, 1
        %v487 = vadd.f32 %v485, %v486
        %v488 = vmul.f32 %v367, %v367
        %v489 = vmul.f32 %v369, %v369
        %v490 = vmul.f32 %v372, %v372
        %v491 = vmul.f32 %v374, %v374
        %v492 = vmul.f32 %v377, %v377
        %v493 = vmul.f32 %v379, %v379
        %v494 = vmul.f32 %v382, %v382
        %v495 = vmul.f32 %v384, %v384
        %v496 = vmul.f32 %v387, %v387
        %v497 = vmul.f32 %v389, %v389
        %v498 = vmul.f32 %v392, %v392
        %v499 = vmul.f32 %v394, %v394
        %v500 = vmul.f32 %v397, %v397
        %v501 = vmul.f32 %v399, %v399
        %v502 = vmul.f32 %v402, %v402
        %v503 = vmul.f32 %v404, %v404
        %v504 = vmul.f32 %v407, %v407
        %v505 = vmul.f32 %v409, %v409
        %v506 = vmul.f32 %v412, %v412
        %v507 = vmul.f32 %v414, %v414
        %v508 = vmul.f32 %v417, %v417
        %v509 = vmul.f32 %v419, %v419
        %v510 = vmul.f32 %v422, %v422
        %v511 = vmul.f32 %v424, %v424
        %v512 = vmul.f32 %v427, %v427
        %v513 = vmul.f32 %v429, %v429
        %v514 = vmul.f32 %v432, %v432
        %v515 = vmul.f32 %v434, %v434
        %v516 = vmul.f32 %v437, %v437
        %v517 = vmul.f32 %v439, %v439
        %v518 = vmul.f32 %v442, %v442
        %v519 = vmul.f32 %v444, %v444
        %v520 = vadd.f32 %v488, %v489
        %v521 = vadd.f32 %v520, %v490
        %v522 = vadd.f32 %v521, %v491
        %v523 = vadd.f32 %v522, %v492
        %v524 = vadd.f32 %v523, %v493
        %v525 = vadd.f32 %v524, %v494
        %v526 = vadd.f32 %v525, %v495
        %v527 = vadd.f32 %v526, %v496
        %v528 = vadd.f32 %v527, %v497
        %v529 = vadd.f32 %v528, %v498
        %v530 = vadd.f32 %v529, %v499
        %v531 = vadd.f32 %v530, %v500
        %v532 = vadd.f32 %v531, %v501
        %v533 = vadd.f32 %v532, %v502
        %v534 = vadd.f32 %v533, %v503
        %v535 = vadd.f32 %v534, %v504
        %v536 = vadd.f32 %v535, %v505
        %v537 = vadd.f32 %v536, %v506
        %v538 = vadd.f32 %v537, %v507
        %v539 = vadd.f32 %v538, %v508
        %v540 = vadd.f32 %v539, %v509
        %v541 = vadd.f32 %v540, %v510
        %v542 = vadd.f32 %v541, %v511
        %v543 = vadd.f32 %v542, %v512
        %v544 = vadd.f32 %v543, %v513
        %v545 = vadd.f32 %v544, %v514
        %v546 = vadd.f32 %v545, %v515
        %v547 = vadd.f32 %v546, %v516
        %v548 = vadd.f32 %v547, %v517
        %v549 = vadd.f32 %v548, %v518
        %v550 = vadd.f32 %v549, %v519
        %v551 = vrot.slane %v550, 4
        %v552 = vadd.f32 %v550, %v551
        %v553 = vrot.slane %v552, 2
        %v554 = vadd.f32 %v552, %v553
        %v555 = vrot.slane %v554, 1
        %v556 = vadd.f32 %v554, %v555
        %vm557 = vcmask 1040384
        %v558 = vsel %vm557, %v487, %v556
        %v559 = vld [vmem:[%s154] sm:$0x3]
        %v560 = vadd.f32 %v559, %v558
        %561 = vst [vmem:[%s154] sm:$0x3] %v560
        %s562 = sand.u32 %s85, 1
        %s563 = scalar_lea.sflag [#allocation3], %s562
        %s564 = sand.u32 %s85, 1
        %s565 = smul.addr %s564, 2
        %s566 = scalar_lea.vmem [#allocation2], %s565
        // Predicated region
        $region33: #{tpu_custom_call.1} parent=27 // pred_check
          %p567 = pneg %p95
        $region34: #{tpu_custom_call.1} parent=27 // pred_check_branch
          %569 = sbr.rel (%p567) target = $region36
        $region35: #{tpu_custom_call.1} parent=27 // pred_region
          %571 = vsyncadd %s563, 0
          %s572 = smul.addr %s20, 2
          %s573 = scalar_lea.hbm %s2, %s572
          %s575 = sshll.u32 %s566, 4
          %s576 = int_to_ptr.vmem [resolvable:$true] %s575
          %s577 = sshll.u32 %s573, 4
          %s578 = int_to_ptr.hbm [resolvable:$true] %s577
          %580 = dma.vmem_to_hbm [thread:$0]  %s576, 32, %s578, %s563
        $region36: #{tpu_custom_call.1} parent=27 // pred_fallthru
          _
      $region28: #{tpu_custom_call.1} parent=5 // pred_fallthru
        _
      %p581 = scmp.le.s32.totalorder 2, %s11
      // Predicated region
      $region37: #{tpu_custom_call.1} parent=5 // pred_check
        %p582 = pneg %p581
      $region38: #{tpu_custom_call.1} parent=5 // pred_check_branch
        %584 = sbr.rel (%p582) target = $region40
      $region39: #{tpu_custom_call.1} parent=5 // pred_region
        %s585 = ssub.s32 %s11, 2
        // Predicated region
        $region41: #{tpu_custom_call.1} parent=39 // pred_check
          %p586 = pneg %p101
        $region42: #{tpu_custom_call.1} parent=39 // pred_check_branch
          %588 = sbr.rel (%p586) target = $region44
        $region43: #{tpu_custom_call.1} parent=39 // pred_region
          %s589 = sand.u32 %s86, 1
          %s590 = scalar_lea.sflag [#allocation3], %s589
          %s591 = sand.u32 %s86, 1
          %s592 = smul.addr %s591, 2
          %s593 = scalar_lea.vmem [#allocation2], %s592
          %595 = dma.done %s590, 32
        $region44: #{tpu_custom_call.1} parent=39 // pred_fallthru
          _
      $region40: #{tpu_custom_call.1} parent=5 // pred_fallthru
        _
    $region6: #{tpu_custom_call.1} parent=1 // loop_footer
      %s15 = sadd.s32 1, %s11
    $region7: #{tpu_custom_call.1} parent=1 // loop_footer_branch
      %10 = sbr.rel target = $region3
    $region8: #{tpu_custom_call.1} parent=1 // loop_exit
      _
    %596 = vsyncpa [#allocation3], 1
    %s597 = scalar_lea.sflag [#allocation3], 1
    %598 = vsyncpa %s597, 1

</llo_original>
